<compile_context>
chip_gen: v6e
topology: v6e:2x2x1
jax: 0.10.0
libtpu: 0.0.40
codegen_flags: <defaults>
</compile_context>

<pallas_src>
import functools

import jax
import jax.numpy as jnp
from jax.experimental import pallas as pl
from jax.experimental.pallas import tpu as pltpu

EMBEDDING_DIM = 8
USER_FEATURE_DIM = 4
MOVIE_FEATURE_DIM = 4
IN_DIM = 2 * EMBEDDING_DIM + USER_FEATURE_DIM + MOVIE_FEATURE_DIM   # 24


def _round_up(x, m):
    return ((x + m - 1) // m) * m


def bandit_kernel(x_ref, w1_ref, b1_ref, w2_ref, b2_ref, w3_ref, b3_ref,
                  out_ref):
    """Fused feature-proj + concat + 3-layer MLP head, batch on the lane axis.

    x_ref  : (TN, 24)  batch-major activations [ue|uf|me|mf] (bf16 or f32)
    w1_ref : (E, 24)   fused first-layer weight (out, in), f32
    b1_ref : (E, 1)    fused first-layer bias
    w2_ref : (E, E)    second-layer weight;   b2_ref : (E, 1)
    w3_ref : (1, E)    final-layer weight;    b3_ref : (1, 1)
    out_ref: (1, TN)   sigmoid reward estimate, lane-dense store
    """
    f32 = jnp.float32

    # Relayout the batch-major tile to batch-on-lanes on the (otherwise idle)
    # XLU.  Upcast first: a 32-bit 2-D transpose is the safest lowering path.
    xt = x_ref[...].astype(f32).T                                    # (24, TN)

    h1 = jnp.dot(w1_ref[...], xt, preferred_element_type=f32) + b1_ref[...]
    h1 = jnp.maximum(h1, 0.0)                                        # (E, TN)

    h2 = jnp.dot(w2_ref[...], h1, preferred_element_type=f32) + b2_ref[...]
    h2 = jnp.maximum(h2, 0.0)                                        # (E, TN)

    logit = jnp.dot(w3_ref[...], h2, preferred_element_type=f32) + b3_ref[...]
    # exp and the approximate reciprocal both live on the EUP slot; the
    # kernel is HBM-bandwidth / per-step-overhead bound, not compute bound.
    out_ref[...] = pl.reciprocal(1.0 + jnp.exp(-logit), approx=True)  # (1, TN)


def _choose_batch_tile(batch, block_batch, x_dtype):
    """Pick the batch tile TN (multiple of 128)."""
    itemsize = jnp.dtype(x_dtype).itemsize
    # The (TN, 24) block is lane-padded to 128 in VMEM and double-buffered.
    # Keep that footprint <= ~12 MiB so the kernel fits v5e's 16 MiB scoped
    # default and v7x's smaller physical VMEM with headroom.
    vmem_cap_tn = max(128, ((12 * 1024 * 1024) // (2 * 128 * itemsize)) // 128 * 128)
    b128 = _round_up(batch, 128)
    tn = min(_round_up(max(block_batch, 128), 128), b128, vmem_cap_tn)
    # v7x has 2 TensorCores: make sure the "parallel" batch axis has >= 2 grid
    # steps to shard whenever the batch is big enough to split.
    if b128 >= 256 and pl.cdiv(batch, tn) < 2:
        tn = _round_up(pl.cdiv(b128, 2), 128)
    return tn


def init_params(key, num_users, num_movies,
                embedding_dim=EMBEDDING_DIM,
                user_feature_dim=USER_FEATURE_DIM,
                movie_feature_dim=MOVIE_FEATURE_DIM):
    """Deterministic parameters matching the nn.Module shapes.

    Linear weights are stored (in, out); biases as (1, out).
    """
    ks = jax.random.split(key, 12)

    def lin(kw, kb, fan_in, fan_out):
        bound = 1.0 / jnp.sqrt(fan_in)
        w = jax.random.uniform(kw, (fan_in, fan_out), jnp.float32, -bound, bound)
        b = jax.random.uniform(kb, (1, fan_out), jnp.float32, -bound, bound)
        return w, b

    params = {}
    params["user_emb_table"] = jax.random.normal(
        ks[0], (num_users, embedding_dim), jnp.float32)
    params["movie_emb_table"] = jax.random.normal(
        ks[1], (num_movies, embedding_dim), jnp.float32)
    params["wu"], params["bu"] = lin(ks[2], ks[3], user_feature_dim, embedding_dim)
    params["wm"], params["bm"] = lin(ks[4], ks[5], movie_feature_dim, embedding_dim)
    w1, params["b1"] = lin(ks[6], ks[7], 2 * embedding_dim, embedding_dim)
    params["w1u"] = w1[:embedding_dim, :]   # half acting on user_emb
    params["w1m"] = w1[embedding_dim:, :]   # half acting on movie_emb
    params["w2"], params["b2"] = lin(ks[8], ks[9], embedding_dim, embedding_dim)
    params["w3"], params["b3"] = lin(ks[10], ks[11], embedding_dim, 1)
    return params


def bandit_forward(params, user_ids, movie_ids, user_features, movie_features,
                   *, block_batch=8192, x_dtype=jnp.bfloat16):
    """Forward pass of nn_linear_bandit_model.

    block_batch: desired batch-tile width.  Large tiles amortise the
      ~0.35 us/step pipeline overhead; the chooser caps it against VMEM and
      ensures >= 2 grid steps (v7x megacore).
    x_dtype: dtype of the streamed activations (bf16 halves the dominant HBM
      read; the kernel computes/accumulates in f32 regardless).
    """
    B = user_ids.shape[0]
    E = EMBEDDING_DIM
    f32 = jnp.float32

    # ---- JAX glue: data-dependent embedding-row gather --------------------
    # TODO(synk): move the gather in-kernel (scalar-prefetched ids +
    # VMEM-resident tables) to drop another HBM round-trip.
    ue = jnp.take(params["user_emb_table"], user_ids, axis=0)      # (B, E)
    me = jnp.take(params["movie_emb_table"], movie_ids, axis=0)    # (B, E)

    # ---- Fold both feature projections into the first MLP layer -----------
    # h1 = relu([ue|uf|me|mf] @ [[w1u],[wu@w1u],[w1m],[wm@w1m]] + b1')
    w1u, w1m = params["w1u"], params["w1m"]
    w1_fused = jnp.concatenate(
        [w1u, params["wu"] @ w1u, w1m, params["wm"] @ w1m], axis=0)      # (24, E)
    b1_fused = params["b1"] + params["bu"] @ w1u + params["bm"] @ w1m    # (1, E)

    # Natural batch-major activation stream: one concat fusion, NO wrapper
    # side transpose/pad materialisation (the relayout happens in-kernel).
    x = jnp.concatenate(
        [ue, user_features, me, movie_features], axis=-1).astype(x_dtype)  # (B, 24)

    w1t = w1_fused.T.astype(f32)      # (E, 24)
    b1t = b1_fused.T.astype(f32)      # (E, 1)
    w2t = params["w2"].T.astype(f32)  # (E, E)
    b2t = params["b2"].T.astype(f32)  # (E, 1)
    w3t = params["w3"].T.astype(f32)  # (1, E)
    b3t = params["b3"].T.astype(f32)  # (1, 1)

    TN = _choose_batch_tile(B, block_batch, x_dtype)
    const = lambda i: (0, 0)   # resident weights/biases: one DMA, not per step

    # Ragged last block (B not a multiple of TN) is handled by Pallas: padded
    # input columns produce garbage that only lands in masked-out output lanes.
    out = pl.pallas_call(
        bandit_kernel,
        out_shape=jax.ShapeDtypeStruct((1, B), jnp.float32),
        grid_spec=pltpu.PrefetchScalarGridSpec(
            num_scalar_prefetch=0,
            grid=(pl.cdiv(B, TN),),
            in_specs=[
                pl.BlockSpec((TN, IN_DIM), lambda i: (i, 0)),   # activations
                pl.BlockSpec((E, IN_DIM), const),               # W1'
                pl.BlockSpec((E, 1), const),                    # b1'
                pl.BlockSpec((E, E), const),                    # W2
                pl.BlockSpec((E, 1), const),                    # b2
                pl.BlockSpec((1, E), const),                    # W3
                pl.BlockSpec((1, 1), const),                    # b3
            ],
            out_specs=pl.BlockSpec((1, TN), lambda i: (0, i)),  # lane-dense out
        ),
        compiler_params=pltpu.CompilerParams(
            dimension_semantics=("parallel",),
            # Matches the v6e/v7x scoped default, raises v5e's 16 MiB default,
            # and stays well under physical VMEM on every generation.
            vmem_limit_bytes=32 * 1024 * 1024,
        ),
    )(x, w1t, b1t, w2t, b2t, w3t, b3t)

    return out.T                                                # (B, 1)


def reference_forward(params, user_ids, movie_ids, user_features, movie_features):
    """Pure-JAX reference, structured exactly like the nn.Module forward."""
    ue = jnp.take(params["user_emb_table"], user_ids, axis=0) \
        + user_features @ params["wu"] + params["bu"]
    me = jnp.take(params["movie_emb_table"], movie_ids, axis=0) \
        + movie_features @ params["wm"] + params["bm"]
    x = jnp.concatenate([ue, me], axis=-1)
    w1 = jnp.concatenate([params["w1u"], params["w1m"]], axis=0)
    h1 = jax.nn.relu(x @ w1 + params["b1"])
    h2 = jax.nn.relu(h1 @ params["w2"] + params["b2"])
    return jax.nn.sigmoid(h2 @ params["w3"] + params["b3"])


if __name__ == "__main__":
    num_users, num_movies, batch = 32, 64, 200

    key = jax.random.PRNGKey(0)
    k_params, k_uid, k_mid, k_uf, k_mf = jax.random.split(key, 5)

    params = init_params(k_params, num_users, num_movies)

    user_ids = jax.random.randint(k_uid, (batch,), 0, num_users, dtype=jnp.int32)
    movie_ids = jax.random.randint(k_mid, (batch,), 0, num_movies, dtype=jnp.int32)
    user_features = jax.random.normal(k_uf, (batch, USER_FEATURE_DIM), jnp.float32)
    movie_features = jax.random.normal(k_mf, (batch, MOVIE_FEATURE_DIM), jnp.float32)

    ref = reference_forward(params, user_ids, movie_ids, user_features, movie_features)

    # f32 activation stream: exact math modulo the EUP approx-reciprocal.
    # (batch=200 -> TN=128, a 2-step grid with a ragged, masked last block.)
    fwd_f32 = jax.jit(functools.partial(bandit_forward, x_dtype=jnp.float32))
    out_f32 = jax.block_until_ready(
        fwd_f32(params, user_ids, movie_ids, user_features, movie_features))
    assert out_f32.shape == (batch, 1), out_f32.shape
    assert jnp.allclose(out_f32, ref, atol=1e-2), (out_f32, ref)

    # Default perf path: bf16 activation stream (looser tolerance).
    fwd = jax.jit(bandit_forward)
    out = jax.block_until_ready(
        fwd(params, user_ids, movie_ids, user_features, movie_features))
    assert out.shape == (batch, 1), out.shape
    assert jnp.allclose(out, ref, atol=3e-2), (out, ref)

    print("KERNEL_OK")
</pallas_src>

<mosaic_0001>
module attributes {stable_mosaic.version = 11 : i64} {
  func.func @bandit_kernel(%arg0: i32, %arg1: memref<128x24xf32, #tpu.memory_space<vmem>>, %arg2: memref<8x24xf32, #tpu.memory_space<vmem>>, %arg3: memref<8x1xf32, #tpu.memory_space<vmem>>, %arg4: memref<8x8xf32, #tpu.memory_space<vmem>>, %arg5: memref<8x1xf32, #tpu.memory_space<vmem>>, %arg6: memref<1x8xf32, #tpu.memory_space<vmem>>, %arg7: memref<1x1xf32, #tpu.memory_space<vmem>>, %arg8: memref<1x128xf32, #tpu.memory_space<vmem>>) attributes {dimension_semantics = [#tpu.dimension_semantics<parallel>], iteration_bounds = array<i64: 2>, scalar_prefetch = 0 : i64, scratch_operands = 0 : i64, tpu.core_type = #tpu.core_type<tc>, window_params = [{transform_indices = @transform_0, window_bounds = array<i64: 128, 24>}, {pipeline_mode = #tpu.pipeline_mode<synchronous>, transform_indices = @transform_1, window_bounds = array<i64: 8, 24>}, {pipeline_mode = #tpu.pipeline_mode<synchronous>, transform_indices = @transform_2, window_bounds = array<i64: 8, 1>}, {pipeline_mode = #tpu.pipeline_mode<synchronous>, transform_indices = @transform_3, window_bounds = array<i64: 8, 8>}, {pipeline_mode = #tpu.pipeline_mode<synchronous>, transform_indices = @transform_4, window_bounds = array<i64: 8, 1>}, {pipeline_mode = #tpu.pipeline_mode<synchronous>, transform_indices = @transform_5, window_bounds = array<i64: 1, 8>}, {pipeline_mode = #tpu.pipeline_mode<synchronous>, transform_indices = @transform_6, window_bounds = array<i64: 1, 1>}, {transform_indices = @transform_7, window_bounds = array<i64: 1, 128>}]} {
    %c0 = arith.constant 0 : index
    %c0_0 = arith.constant 0 : index
    %0 = vector.load %arg1[%c0, %c0_0] : memref<128x24xf32, #tpu.memory_space<vmem>>, vector<128x24xf32>
    %1 = tpu.transpose %0, [1, 0] : vector<128x24xf32> -> vector<24x128xf32>
    %c0_1 = arith.constant 0 : index
    %c0_2 = arith.constant 0 : index
    %2 = vector.load %arg2[%c0_1, %c0_2] : memref<8x24xf32, #tpu.memory_space<vmem>>, vector<8x24xf32>
    %cst = arith.constant dense<0.000000e+00> : vector<8x128xf32>
    %3 = tpu.matmul %2, %1, %cst {dimension_numbers = #tpu.dot_dimension_numbers<[1], [0], [0], [1], [0, 0, 1, 1], [], []>} : vector<8x24xf32>, vector<24x128xf32>, vector<8x128xf32> -> vector<8x128xf32>
    %c0_3 = arith.constant 0 : index
    %c0_4 = arith.constant 0 : index
    %4 = vector.load %arg3[%c0_3, %c0_4] : memref<8x1xf32, #tpu.memory_space<vmem>>, vector<8x1xf32>
    %5 = vector.broadcast %4 : vector<8x1xf32> to vector<8x128xf32>
    %6 = arith.addf %3, %5 : vector<8x128xf32>
    %cst_5 = arith.constant 0.000000e+00 : f32
    %7 = vector.broadcast %cst_5 : f32 to vector<8x128xf32>
    %8 = arith.maximumf %6, %7 : vector<8x128xf32>
    %c0_6 = arith.constant 0 : index
    %c0_7 = arith.constant 0 : index
    %9 = vector.load %arg4[%c0_6, %c0_7] : memref<8x8xf32, #tpu.memory_space<vmem>>, vector<8x8xf32>
    %cst_8 = arith.constant dense<0.000000e+00> : vector<8x128xf32>
    %10 = tpu.matmul %9, %8, %cst_8 {dimension_numbers = #tpu.dot_dimension_numbers<[1], [0], [0], [1], [0, 0, 1, 1], [], []>} : vector<8x8xf32>, vector<8x128xf32>, vector<8x128xf32> -> vector<8x128xf32>
    %c0_9 = arith.constant 0 : index
    %c0_10 = arith.constant 0 : index
    %11 = vector.load %arg5[%c0_9, %c0_10] : memref<8x1xf32, #tpu.memory_space<vmem>>, vector<8x1xf32>
    %12 = vector.broadcast %11 : vector<8x1xf32> to vector<8x128xf32>
    %13 = arith.addf %10, %12 : vector<8x128xf32>
    %cst_11 = arith.constant 0.000000e+00 : f32
    %14 = vector.broadcast %cst_11 : f32 to vector<8x128xf32>
    %15 = arith.maximumf %13, %14 : vector<8x128xf32>
    %c0_12 = arith.constant 0 : index
    %c0_13 = arith.constant 0 : index
    %16 = vector.load %arg6[%c0_12, %c0_13] : memref<1x8xf32, #tpu.memory_space<vmem>>, vector<1x8xf32>
    %cst_14 = arith.constant dense<0.000000e+00> : vector<1x128xf32>
    %17 = tpu.matmul %16, %15, %cst_14 {dimension_numbers = #tpu.dot_dimension_numbers<[1], [0], [0], [1], [0, 0, 1, 1], [], []>} : vector<1x8xf32>, vector<8x128xf32>, vector<1x128xf32> -> vector<1x128xf32>
    %c0_15 = arith.constant 0 : index
    %c0_16 = arith.constant 0 : index
    %18 = vector.load %arg7[%c0_15, %c0_16] : memref<1x1xf32, #tpu.memory_space<vmem>>, vector<1x1xf32>
    %19 = vector.broadcast %18 : vector<1x1xf32> to vector<1x128xf32>
    %20 = arith.addf %17, %19 : vector<1x128xf32>
    %cst_17 = arith.constant 0.000000e+00 : f32
    %21 = vector.broadcast %cst_17 : f32 to vector<1x128xf32>
    %22 = arith.subf %21, %20 : vector<1x128xf32>
    %23 = math.exp %22 : vector<1x128xf32>
    %cst_18 = arith.constant 1.000000e+00 : f32
    %24 = vector.broadcast %cst_18 : f32 to vector<1x128xf32>
    %25 = arith.addf %24, %23 : vector<1x128xf32>
    %26 = tpu.reciprocal %25 {approx = true} : vector<1x128xf32> -> vector<1x128xf32>
    %c0_19 = arith.constant 0 : index
    %c0_20 = arith.constant 0 : index
    %27 = vector.load %arg8[%c0_19, %c0_20] : memref<1x128xf32, #tpu.memory_space<vmem>>, vector<1x128xf32>
    tpu.vector_store %arg8[%c0_19, %c0_20], %26 {strides = array<i32>} : memref<1x128xf32, #tpu.memory_space<vmem>>, vector<1x128xf32>,
    return
  }
  func.func @transform_0(%arg0: i32) -> (i32, i32) {
    %c0_i32 = arith.constant 0 : i32
    %c0_i32_0 = arith.constant 0 : i32
    return %arg0, %c0_i32 : i32, i32
  }
  func.func @transform_1(%arg0: i32) -> (i32, i32) {
    %c0_i32 = arith.constant 0 : i32
    %c0_i32_0 = arith.constant 0 : i32
    %c0_i32_1 = arith.constant 0 : i32
    return %c0_i32, %c0_i32_0 : i32, i32
  }
  func.func @transform_2(%arg0: i32) -> (i32, i32) {
    %c0_i32 = arith.constant 0 : i32
    %c0_i32_0 = arith.constant 0 : i32
    %c0_i32_1 = arith.constant 0 : i32
    return %c0_i32, %c0_i32_0 : i32, i32
  }
  func.func @transform_3(%arg0: i32) -> (i32, i32) {
    %c0_i32 = arith.constant 0 : i32
    %c0_i32_0 = arith.constant 0 : i32
    %c0_i32_1 = arith.constant 0 : i32
    return %c0_i32, %c0_i32_0 : i32, i32
  }
  func.func @transform_4(%arg0: i32) -> (i32, i32) {
    %c0_i32 = arith.constant 0 : i32
    %c0_i32_0 = arith.constant 0 : i32
    %c0_i32_1 = arith.constant 0 : i32
    return %c0_i32, %c0_i32_0 : i32, i32
  }
  func.func @transform_5(%arg0: i32) -> (i32, i32) {
    %c0_i32 = arith.constant 0 : i32
    %c0_i32_0 = arith.constant 0 : i32
    %c0_i32_1 = arith.constant 0 : i32
    return %c0_i32, %c0_i32_0 : i32, i32
  }
  func.func @transform_6(%arg0: i32) -> (i32, i32) {
    %c0_i32 = arith.constant 0 : i32
    %c0_i32_0 = arith.constant 0 : i32
    %c0_i32_1 = arith.constant 0 : i32
    return %c0_i32, %c0_i32_0 : i32, i32
  }
  func.func @transform_7(%arg0: i32) -> (i32, i32) {
    %c0_i32 = arith.constant 0 : i32
    %c0_i32_0 = arith.constant 0 : i32
    return %c0_i32, %arg0 : i32, i32
  }
}

</mosaic_0001>

<llo_original>
// kernel: bandit_forward.1
$region0: #{bandit_forward.1}
  #allocation0 [shape = 'u32[]', space=smem, size = 0x4, offset = 0x4, fixed_abs, tag = 'smem constant byte address 0x4 - core index']
  #allocation1 [shape = 'u32[144,128]{1,0:T(1,128)}', space=vmem, size = 0x12000, scoped, tag = 'internal scratch']
  #allocation2 [shape = 'f32[1,1]{1,0:T(1,128)S(1)}', space=vmem, size = 0x200, scoped, tag = 'scoped memory for bandit_forward.1']
  %s0 = inlined_call_operand.vmem [shape: f32[200,24], index: 0, kind: input, shape index: {}]
  %s1 = inlined_call_operand.vmem [shape: f32[8,24], index: 1, kind: input, shape index: {}]
  %s2 = inlined_call_operand.vmem [shape: f32[8,1], index: 2, kind: input, shape index: {}]
  %s3 = inlined_call_operand.vmem [shape: f32[8,8], index: 3, kind: input, shape index: {}]
  %s4 = inlined_call_operand.vmem [shape: f32[8,1], index: 4, kind: input, shape index: {}]
  %s5 = inlined_call_operand.vmem [shape: f32[1,8], index: 5, kind: input, shape index: {}]
  %s6 = inlined_call_operand.<no memory space> [shape: f32[1,1], index: 6, kind: input, shape index: {}]
  %s7 = inlined_call_operand.hbm [shape: f32[1,200], index: 7, kind: output, shape index: {}]
  %s8 = sld [smem:[#allocation0]]
  $region61: #{bandit_forward.1} parent=0
    _
  %s10 = ssub.s32 1, %s8
  %s11 = scalar_select 0, %s10, %s8
  %v12 = vstv %s6
  %13 = vst [vmem:[#allocation2] sm:$0x1] %v12
  $region1: #{bandit_forward.1} parent=0
    #allocation3 [shape = 'u8[1024]{0}', space=vmem, size = 0x400, scoped, tag = 'output window, operand 0']
    #allocation4 [shape = 's32[2]{0}', space=sflag, size = 0x8, scoped, tag = 'scoped memory for bandit_forward.1']
    %14 = vsyncpa [#allocation4], 0
    %s15 = scalar_lea.sflag [#allocation4], 1
    %16 = vsyncpa %s15, 0
    loop: start=0, step=1, limit=4
    $region2: #{bandit_forward.1} parent=1 // loop_pre_header
      _
    $region3: #{bandit_forward.1} parent=1 // loop_header
      %s18 = sphi 0, %s22
      %p19 = scmp.ge.s32.totalorder %s18, 4
      %s28 = sphi 0, %s30
      %s31 = sphi 0, %s28
      %s32 = sphi 0, %s31
      %s48 = sphi 0, %s32
      %s52 = sphi 0, %s52
      %s54 = sphi 0, %s52
      %s55 = sphi 0, %s54
      %s69 = sphi 0, %s55
      %s73 = sphi 0, %s73
      %s75 = sphi 0, %s73
      %s76 = sphi 0, %s75
      %s90 = sphi 0, %s76
      %s94 = sphi 0, %s94
      %s96 = sphi 0, %s94
      %s97 = sphi 0, %s96
      %s111 = sphi 0, %s97
      %s115 = sphi 0, %s115
      %s117 = sphi 0, %s115
      %s118 = sphi 0, %s117
      %s132 = sphi 0, %s118
      %s136 = sphi 0, %s136
      %s138 = sphi 0, %s136
      %s139 = sphi 0, %s138
      %s153 = sphi 0, %s139
      %s157 = sphi 0, %s157
      %s159 = sphi 0, %s157
      %s160 = sphi 0, %s159
      %s174 = sphi 0, %s160
      %s180 = sphi 0, %s182
      %s183 = sphi 0, %s180
      %s184 = sphi 0, %s183
      %s200 = sphi 0, %s184
    $region4: #{bandit_forward.1} parent=1 // loop_header_branch
      %21 = sbr.rel (%p19) target = $region8
    $region5: #{bandit_forward.1} parent=1 // loop_body
      %s23 = ssub.s32 %s18, 1
      %s24 = ssub.s32 %s18, 2
      %s25 = sadd.s32 %s18, 1
      %s26 = ssub.s32 %s18, %s25
      %p27 = scmp.eq.s32.totalorder %s26, 0
      %s29 = sadd.s32 %s28, 1
      %s30 = scalar_select %p27, %s28, %s29
      %p33 = pneg %p27
      %p34 = scmp.eq.s32.totalorder %s18, 1
      %p35 = por %p33, %p34
      %p36 = scmp.ne.s32.totalorder %s28, %s31
      %p37 = scmp.eq.s32.totalorder %s18, 0
      %p38 = por %p36, %p37
      %p39 = scmp.ne.s32.totalorder %s28, %s31
      %p40 = scmp.eq.s32.totalorder %s23, 1
      %p41 = por %p39, %p40
      %p42 = scmp.ne.s32.totalorder %s31, %s32
      %p43 = scmp.eq.s32.totalorder %s23, 0
      %p44 = por %p42, %p43
      %p45 = scmp.ne.s32.totalorder %s31, %s32
      %p46 = scmp.eq.s32.totalorder %s24, 1
      %p47 = por %p45, %p46
      %p49 = scmp.ne.s32.totalorder %s32, %s48
      %p50 = scmp.eq.s32.totalorder %s24, 0
      %p51 = por %p49, %p50
      %s53 = sadd.s32 %s52, 1
      %p56 = scmp.eq.s32.totalorder %s18, 1
      %p57 = scmp.ne.s32.totalorder %s52, %s54
      %p58 = scmp.eq.s32.totalorder %s18, 0
      %p59 = por %p57, %p58
      %p60 = scmp.ne.s32.totalorder %s52, %s54
      %p61 = scmp.eq.s32.totalorder %s23, 1
      %p62 = por %p60, %p61
      %p63 = scmp.ne.s32.totalorder %s54, %s55
      %p64 = scmp.eq.s32.totalorder %s23, 0
      %p65 = por %p63, %p64
      %p66 = scmp.ne.s32.totalorder %s54, %s55
      %p67 = scmp.eq.s32.totalorder %s24, 1
      %p68 = por %p66, %p67
      %p70 = scmp.ne.s32.totalorder %s55, %s69
      %p71 = scmp.eq.s32.totalorder %s24, 0
      %p72 = por %p70, %p71
      %s74 = sadd.s32 %s73, 1
      %p77 = scmp.eq.s32.totalorder %s18, 1
      %p78 = scmp.ne.s32.totalorder %s73, %s75
      %p79 = scmp.eq.s32.totalorder %s18, 0
      %p80 = por %p78, %p79
      %p81 = scmp.ne.s32.totalorder %s73, %s75
      %p82 = scmp.eq.s32.totalorder %s23, 1
      %p83 = por %p81, %p82
      %p84 = scmp.ne.s32.totalorder %s75, %s76
      %p85 = scmp.eq.s32.totalorder %s23, 0
      %p86 = por %p84, %p85
      %p87 = scmp.ne.s32.totalorder %s75, %s76
      %p88 = scmp.eq.s32.totalorder %s24, 1
      %p89 = por %p87, %p88
      %p91 = scmp.ne.s32.totalorder %s76, %s90
      %p92 = scmp.eq.s32.totalorder %s24, 0
      %p93 = por %p91, %p92
      %s95 = sadd.s32 %s94, 1
      %p98 = scmp.eq.s32.totalorder %s18, 1
      %p99 = scmp.ne.s32.totalorder %s94, %s96
      %p100 = scmp.eq.s32.totalorder %s18, 0
      %p101 = por %p99, %p100
      %p102 = scmp.ne.s32.totalorder %s94, %s96
      %p103 = scmp.eq.s32.totalorder %s23, 1
      %p104 = por %p102, %p103
      %p105 = scmp.ne.s32.totalorder %s96, %s97
      %p106 = scmp.eq.s32.totalorder %s23, 0
      %p107 = por %p105, %p106
      %p108 = scmp.ne.s32.totalorder %s96, %s97
      %p109 = scmp.eq.s32.totalorder %s24, 1
      %p110 = por %p108, %p109
      %p112 = scmp.ne.s32.totalorder %s97, %s111
      %p113 = scmp.eq.s32.totalorder %s24, 0
      %p114 = por %p112, %p113
      %s116 = sadd.s32 %s115, 1
      %p119 = scmp.eq.s32.totalorder %s18, 1
      %p120 = scmp.ne.s32.totalorder %s115, %s117
      %p121 = scmp.eq.s32.totalorder %s18, 0
      %p122 = por %p120, %p121
      %p123 = scmp.ne.s32.totalorder %s115, %s117
      %p124 = scmp.eq.s32.totalorder %s23, 1
      %p125 = por %p123, %p124
      %p126 = scmp.ne.s32.totalorder %s117, %s118
      %p127 = scmp.eq.s32.totalorder %s23, 0
      %p128 = por %p126, %p127
      %p129 = scmp.ne.s32.totalorder %s117, %s118
      %p130 = scmp.eq.s32.totalorder %s24, 1
      %p131 = por %p129, %p130
      %p133 = scmp.ne.s32.totalorder %s118, %s132
      %p134 = scmp.eq.s32.totalorder %s24, 0
      %p135 = por %p133, %p134
      %s137 = sadd.s32 %s136, 1
      %p140 = scmp.eq.s32.totalorder %s18, 1
      %p141 = scmp.ne.s32.totalorder %s136, %s138
      %p142 = scmp.eq.s32.totalorder %s18, 0
      %p143 = por %p141, %p142
      %p144 = scmp.ne.s32.totalorder %s136, %s138
      %p145 = scmp.eq.s32.totalorder %s23, 1
      %p146 = por %p144, %p145
      %p147 = scmp.ne.s32.totalorder %s138, %s139
      %p148 = scmp.eq.s32.totalorder %s23, 0
      %p149 = por %p147, %p148
      %p150 = scmp.ne.s32.totalorder %s138, %s139
      %p151 = scmp.eq.s32.totalorder %s24, 1
      %p152 = por %p150, %p151
      %p154 = scmp.ne.s32.totalorder %s139, %s153
      %p155 = scmp.eq.s32.totalorder %s24, 0
      %p156 = por %p154, %p155
      %s158 = sadd.s32 %s157, 1
      %p161 = scmp.eq.s32.totalorder %s18, 1
      %p162 = scmp.ne.s32.totalorder %s157, %s159
      %p163 = scmp.eq.s32.totalorder %s18, 0
      %p164 = por %p162, %p163
      %p165 = scmp.ne.s32.totalorder %s157, %s159
      %p166 = scmp.eq.s32.totalorder %s23, 1
      %p167 = por %p165, %p166
      %p168 = scmp.ne.s32.totalorder %s159, %s160
      %p169 = scmp.eq.s32.totalorder %s23, 0
      %p170 = por %p168, %p169
      %p171 = scmp.ne.s32.totalorder %s159, %s160
      %p172 = scmp.eq.s32.totalorder %s24, 1
      %p173 = por %p171, %p172
      %p175 = scmp.ne.s32.totalorder %s160, %s174
      %p176 = scmp.eq.s32.totalorder %s24, 0
      %p177 = por %p175, %p176
      %s178 = ssub.s32 %s18, %s25
      %p179 = scmp.eq.s32.totalorder %s178, 0
      %s181 = sadd.s32 %s180, 1
      %s182 = scalar_select %p179, %s180, %s181
      %p185 = pneg %p179
      %p186 = scmp.eq.s32.totalorder %s18, 1
      %p187 = por %p185, %p186
      %p188 = scmp.ne.s32.totalorder %s180, %s183
      %p189 = scmp.eq.s32.totalorder %s18, 0
      %p190 = por %p188, %p189
      %p191 = scmp.ne.s32.totalorder %s180, %s183
      %p192 = scmp.eq.s32.totalorder %s23, 1
      %p193 = por %p191, %p192
      %p194 = scmp.ne.s32.totalorder %s183, %s184
      %p195 = scmp.eq.s32.totalorder %s23, 0
      %p196 = por %p194, %p195
      %p197 = scmp.ne.s32.totalorder %s183, %s184
      %p198 = scmp.eq.s32.totalorder %s24, 1
      %p199 = por %p197, %p198
      %p201 = scmp.ne.s32.totalorder %s184, %s200
      %p202 = scmp.eq.s32.totalorder %s24, 0
      %p203 = por %p201, %p202
      %p204 = scmp.le.s32.totalorder 1, %s18
      %p205 = scmp.lt.s32.totalorder %s18, 3
      %p206 = pnand %p204, %p205
      %p207 = pneg %p206
      // Predicated region
      $region9: #{bandit_forward.1} parent=5 // pred_check
        _
      $region10: #{bandit_forward.1} parent=5 // pred_check_branch
        %209 = sbr.rel (%p206) target = $region12
      $region11: #{bandit_forward.1} parent=5 // pred_region
        %s210 = ssub.s32 %s18, 1
        // Predicated region
        $region13: #{bandit_forward.1} parent=11 // pred_check
          %p211 = pneg %p65
        $region14: #{bandit_forward.1} parent=11 // pred_check_branch
          %213 = sbr.rel (%p211) target = $region16
        $region15: #{bandit_forward.1} parent=11 // pred_region
          _
        $region16: #{bandit_forward.1} parent=11 // pred_fallthru
          _
        // Predicated region
        $region17: #{bandit_forward.1} parent=11 // pred_check
          %p214 = pneg %p86
        $region18: #{bandit_forward.1} parent=11 // pred_check_branch
          %216 = sbr.rel (%p214) target = $region20
        $region19: #{bandit_forward.1} parent=11 // pred_region
          _
        $region20: #{bandit_forward.1} parent=11 // pred_fallthru
          _
        // Predicated region
        $region21: #{bandit_forward.1} parent=11 // pred_check
          %p217 = pneg %p107
        $region22: #{bandit_forward.1} parent=11 // pred_check_branch
          %219 = sbr.rel (%p217) target = $region24
        $region23: #{bandit_forward.1} parent=11 // pred_region
          _
        $region24: #{bandit_forward.1} parent=11 // pred_fallthru
          _
        // Predicated region
        $region25: #{bandit_forward.1} parent=11 // pred_check
          %p220 = pneg %p128
        $region26: #{bandit_forward.1} parent=11 // pred_check_branch
          %222 = sbr.rel (%p220) target = $region28
        $region27: #{bandit_forward.1} parent=11 // pred_region
          _
        $region28: #{bandit_forward.1} parent=11 // pred_fallthru
          _
        // Predicated region
        $region29: #{bandit_forward.1} parent=11 // pred_check
          %p223 = pneg %p149
        $region30: #{bandit_forward.1} parent=11 // pred_check_branch
          %225 = sbr.rel (%p223) target = $region32
        $region31: #{bandit_forward.1} parent=11 // pred_region
          _
        $region32: #{bandit_forward.1} parent=11 // pred_fallthru
          _
        // Predicated region
        $region33: #{bandit_forward.1} parent=11 // pred_check
          %p226 = pneg %p170
        $region34: #{bandit_forward.1} parent=11 // pred_check_branch
          %228 = sbr.rel (%p226) target = $region36
        $region35: #{bandit_forward.1} parent=11 // pred_region
          _
        $region36: #{bandit_forward.1} parent=11 // pred_fallthru
          _
      $region12: #{bandit_forward.1} parent=5 // pred_fallthru
        _
      %p229 = scmp.lt.s32.totalorder %s18, 2
      // Predicated region
      $region37: #{bandit_forward.1} parent=5 // pred_check
        %p230 = pneg %p229
      $region38: #{bandit_forward.1} parent=5 // pred_check_branch
        %232 = sbr.rel (%p230) target = $region40
      $region39: #{bandit_forward.1} parent=5 // pred_region
        // Predicated region
        $region41: #{bandit_forward.1} parent=39 // pred_check
          %p233 = pneg %p38
        $region42: #{bandit_forward.1} parent=39 // pred_check_branch
          %235 = sbr.rel (%p233) target = $region44
        $region43: #{bandit_forward.1} parent=39 // pred_region
          %s236 = smul.u32 16, %s18
          %s237 = ssub.s32 25, %s236
          %p238 = scmp.lt.s32.totalorder %s237, 16
          %s239 = scalar_select %p238, %s237, 16
          %s240 = smul.u32 128, %s239
          %p241 = scmp.lt.s32.totalorder %s236, 24
          %s242 = scalar_select %p241, %s236, 24
          %s243 = smul.addr %s242, 8
          %s244 = scalar_lea.vmem %s0, %s243
          %s245 = smul.u32 16, %s18
          %s246 = ssub.s32 25, %s245
          %p247 = scmp.lt.s32.totalorder %s246, 16
          %s248 = scalar_select %p247, %s246, 16
          %s249 = smul.u32 128, %s248
        $region44: #{bandit_forward.1} parent=39 // pred_fallthru
          _
      $region40: #{bandit_forward.1} parent=5 // pred_fallthru
        _
      %p250 = scmp.le.s32.totalorder 1, %s18
      %p251 = scmp.lt.s32.totalorder %s18, 3
      %p252 = pnand %p250, %p251
      %p253 = pneg %p252
      // Predicated region
      $region45: #{bandit_forward.1} parent=5 // pred_check
        _
      $region46: #{bandit_forward.1} parent=5 // pred_check_branch
        %255 = sbr.rel (%p252) target = $region48
      $region47: #{bandit_forward.1} parent=5 // pred_region
        %s256 = ssub.s32 %s18, 1
        %s257 = smul.u32 16, %s23
        %s258 = ssub.s32 25, %s257
        %p259 = scmp.lt.s32.totalorder %s258, 16
        %s260 = scalar_select %p259, %s258, 16
        %s261 = smul.u32 128, %s260
        %p262 = scmp.lt.s32.totalorder %s257, 24
        %s263 = scalar_select %p262, %s257, 24
        %s264 = smul.addr %s263, 8
        %s265 = scalar_lea.vmem %s0, %s264
        %p266 = pneg %p44
        %p267 = pneg %p41
        %p268 = pneg %p65
        %p269 = pneg %p62
        %p270 = pneg %p86
        %p271 = pneg %p83
        %p272 = pneg %p107
        %p273 = pneg %p104
        %p274 = pneg %p128
        %p275 = pneg %p125
        %p276 = pneg %p149
        %p277 = pneg %p146
        %p278 = pneg %p170
        %p279 = pneg %p167
        %p280 = pneg %p196
        %p281 = pneg %p193
        %s282 = sand.u32 %s183, 1
        %s283 = scalar_lea.sflag [#allocation4], %s282
        %s284 = sand.u32 %s183, 1
        %s285 = scalar_lea.vmem [#allocation3], %s284
        %s286 = smul.u32 16, %s23
        %s287 = ssub.s32 25, %s286
        %p288 = scmp.lt.s32.totalorder %s287, 16
        %s289 = scalar_select %p288, %s287, 16
        %s290 = smul.u32 128, %s289
        %p291 = scmp.lt.s32.totalorder %s286, 24
        %s292 = scalar_select %p291, %s286, 24
        %s293 = smul.addr %s292, 8
        %s294 = scalar_lea.vmem %s0, %s293
        %s295 = smul.u32 16, %s23
        %s296 = ssub.s32 25, %s295
        %p297 = scmp.lt.s32.totalorder %s296, 16
        %s298 = scalar_select %p297, %s296, 16
        %s299 = smul.u32 128, %s298
        %v300 = vld [vmem:[%s294] sm:$0xff]
        %v301 = vld [vmem:[%s294 + $0x8] sm:$0xff]
        %v302 = vld [vmem:[%s294 + $0x10] sm:$0xff]
        %v303 = vld [vmem:[%s294 + $0x18] sm:$0xff]
        %v304 = vld [vmem:[%s294 + $0x20] sm:$0xff]
        %v305 = vld [vmem:[%s294 + $0x28] sm:$0xff]
        %v306 = vld [vmem:[%s294 + $0x30] sm:$0xff]
        %v307 = vld [vmem:[%s294 + $0x38] sm:$0xff]
        %v308 = vld [vmem:[%s294 + $0x40] sm:$0xff]
        %v309 = vld [vmem:[%s294 + $0x48] sm:$0xff]
        %v310 = vld [vmem:[%s294 + $0x50] sm:$0xff]
        %v311 = vld [vmem:[%s294 + $0x58] sm:$0xff]
        %v312 = vld [vmem:[%s294 + $0x60] sm:$0xff]
        %v313 = vld [vmem:[%s294 + $0x68] sm:$0xff]
        %v314 = vld [vmem:[%s294 + $0x70] sm:$0xff]
        %v315 = vld [vmem:[%s294 + $0x78] sm:$0xff]
        %v316 = vld [vmem:[%s1] sm:$0xff]
        %v317 = vld [vmem:[%s2] sm:$0xff]
        %319 = vset.pattern.permute.xlu0 0
        %320 = vperm.xlu0 %319, %v317
        %v321 = vpop.permute.xlu0 %320
        %vm323 = vcmask 195584
        %v325 = vsel %vm323, %v316, 0
        %v328 = vsel %vm323, %v300, 0
        %v331 = vsel %vm323, %v301, 0
        %v334 = vsel %vm323, %v302, 0
        %v337 = vsel %vm323, %v303, 0
        %v340 = vsel %vm323, %v304, 0
        %v343 = vsel %vm323, %v305, 0
        %v346 = vsel %vm323, %v306, 0
        %v349 = vsel %vm323, %v307, 0
        %v352 = vsel %vm323, %v308, 0
        %v355 = vsel %vm323, %v309, 0
        %v358 = vsel %vm323, %v310, 0
        %v361 = vsel %vm323, %v311, 0
        %v364 = vsel %vm323, %v312, 0
        %v367 = vsel %vm323, %v313, 0
        %v370 = vsel %vm323, %v314, 0
        %v373 = vsel %vm323, %v315, 0
        %375 = vmatprep.subr.mxu0 0.0
        %376 = vmatpush1.xpose.msra.mxu0 %v373
        %377 = vmatprep.subr.mxu0 0.0
        %378 = vmatpush1.xpose.msra.mxu0 %v370
        %379 = vmatprep.subr.mxu0 0.0
        %380 = vmatpush1.xpose.msra.mxu0 %v367
        %381 = vmatprep.subr.mxu0 0.0
        %382 = vmatpush1.xpose.msra.mxu0 %v364
        %383 = vmatprep.subr.mxu0 0.0
        %384 = vmatpush1.xpose.msra.mxu0 %v361
        %385 = vmatprep.subr.mxu0 0.0
        %386 = vmatpush1.xpose.msra.mxu0 %v358
        %387 = vmatprep.subr.mxu0 0.0
        %388 = vmatpush1.xpose.msra.mxu0 %v355
        %389 = vmatprep.subr.mxu0 0.0
        %390 = vmatpush1.xpose.msra.mxu0 %v352
        %391 = vmatprep.subr.mxu0 0.0
        %392 = vmatpush1.xpose.msra.mxu0 %v349
        %393 = vmatprep.subr.mxu0 0.0
        %394 = vmatpush1.xpose.msra.mxu0 %v346
        %395 = vmatprep.subr.mxu0 0.0
        %396 = vmatpush1.xpose.msra.mxu0 %v343
        %397 = vmatprep.subr.mxu0 0.0
        %398 = vmatpush1.xpose.msra.mxu0 %v340
        %399 = vmatprep.subr.mxu0 0.0
        %400 = vmatpush1.xpose.msra.mxu0 %v337
        %401 = vmatprep.subr.mxu0 0.0
        %402 = vmatpush1.xpose.msra.mxu0 %v334
        %403 = vmatprep.subr.mxu0 0.0
        %404 = vmatpush1.xpose.msra.mxu0 %v331
        %405 = vmatprep.subr.mxu0 0.0
        %406 = vmatpush1.xpose.msra.mxu0 %v328
        %407 = vmatprep.subr.mxu0 0.0
        %408 = vmatpush2.xpose.msra.mxu0 0.0
        %409 = vmatprep.subr.mxu0 0.0
        %410 = vmatpush2.xpose.msra.mxu0 0.0
        %411 = vmatprep.subr.mxu0 0.0
        %412 = vmatpush2.xpose.msra.mxu0 0.0
        %413 = vmatprep.subr.mxu0 0.0
        %414 = vmatpush2.xpose.msra.mxu0 0.0
        %415 = vmatprep.subr.mxu0 0.0
        %416 = vmatpush2.xpose.msra.mxu0 0.0
        %417 = vmatprep.subr.mxu0 0.0
        %418 = vmatpush2.xpose.msra.mxu0 0.0
        %419 = vmatprep.subr.mxu0 0.0
        %420 = vmatpush2.xpose.msra.mxu0 0.0
        %421 = vmatprep.subr.mxu0 0.0
        %422 = vmatpush2.xpose.msra.mxu0 0.0
        %423 = vmatprep.subr.mxu0 0.0
        %424 = vmatpush2.xpose.msra.mxu0 0.0
        %425 = vmatprep.subr.mxu0 0.0
        %426 = vmatpush2.xpose.msra.mxu0 0.0
        %427 = vmatprep.subr.mxu0 0.0
        %428 = vmatpush2.xpose.msra.mxu0 0.0
        %429 = vmatprep.subr.mxu0 0.0
        %430 = vmatpush2.xpose.msra.mxu0 0.0
        %431 = vmatprep.subr.mxu0 0.0
        %432 = vmatpush2.xpose.msra.mxu0 0.0
        %433 = vmatprep.subr.mxu0 0.0
        %434 = vmatpush2.xpose.msra.mxu0 0.0
        %435 = vmatprep.subr.mxu0 0.0
        %436 = vmatpush2.xpose.msra.mxu0 0.0
        %437 = vmatprep.subr.mxu0 0.0
        %438 = vmatpush2.xpose.msra.mxu0 0.0
        %439 = vmatprep.mubr.f32.mxu0 0.0
        %440 = vmatmul.mubr.f32.gmra.mxu0 %v325
        %v441 = vpop.f32.mrf.mxu0
        %v442 = vadd.f32 %v321, %v441
        %v443 = vpop.f32.mrf.mxu0
        %444 = vdwg.mxu0
        %v445 = vmax.f32 %v442, 0.0
        %v446 = vld [vmem:[%s3] sm:$0xff]
        %v447 = vld [vmem:[%s4] sm:$0xff]
        %449 = vset.pattern.permute.xlu0 0
        %450 = vperm.xlu0 %449, %v447
        %v451 = vpop.permute.xlu0 %450
        %vm453 = vcmask 64512
        %v455 = vsel %vm453, %v446, 0
        %457 = vmatprep.subr.mxu0 0.0
        %458 = vmatpush1.msra.mxu0 0.0
        %459 = vmatprep.subr.mxu0 0.0
        %460 = vmatpush1.msra.mxu0 0.0
        %461 = vmatprep.subr.mxu0 0.0
        %462 = vmatpush1.msra.mxu0 0.0
        %463 = vmatprep.subr.mxu0 0.0
        %464 = vmatpush1.msra.mxu0 0.0
        %465 = vmatprep.subr.mxu0 0.0
        %466 = vmatpush1.msra.mxu0 0.0
        %467 = vmatprep.subr.mxu0 0.0
        %468 = vmatpush1.msra.mxu0 0.0
        %469 = vmatprep.subr.mxu0 0.0
        %470 = vmatpush1.msra.mxu0 0.0
        %471 = vmatprep.subr.mxu0 0.0
        %472 = vmatpush1.msra.mxu0 0.0
        %473 = vmatprep.subr.mxu0 0.0
        %474 = vmatpush1.msra.mxu0 0.0
        %475 = vmatprep.subr.mxu0 0.0
        %476 = vmatpush1.msra.mxu0 0.0
        %477 = vmatprep.subr.mxu0 0.0
        %478 = vmatpush1.msra.mxu0 0.0
        %479 = vmatprep.subr.mxu0 0.0
        %480 = vmatpush1.msra.mxu0 0.0
        %481 = vmatprep.subr.mxu0 0.0
        %482 = vmatpush1.msra.mxu0 0.0
        %483 = vmatprep.subr.mxu0 0.0
        %484 = vmatpush1.msra.mxu0 0.0
        %485 = vmatprep.subr.mxu0 0.0
        %486 = vmatpush1.msra.mxu0 0.0
        %487 = vmatprep.subr.mxu0 0.0
        %488 = vmatpush1.msra.mxu0 %v445
        %489 = vmatprep.subr.mxu0 0.0
        %490 = vmatpush2.msra.mxu0 0.0
        %491 = vmatprep.subr.mxu0 0.0
        %492 = vmatpush2.msra.mxu0 0.0
        %493 = vmatprep.subr.mxu0 0.0
        %494 = vmatpush2.msra.mxu0 0.0
        %495 = vmatprep.subr.mxu0 0.0
        %496 = vmatpush2.msra.mxu0 0.0
        %497 = vmatprep.subr.mxu0 0.0
        %498 = vmatpush2.msra.mxu0 0.0
        %499 = vmatprep.subr.mxu0 0.0
        %500 = vmatpush2.msra.mxu0 0.0
        %501 = vmatprep.subr.mxu0 0.0
        %502 = vmatpush2.msra.mxu0 0.0
        %503 = vmatprep.subr.mxu0 0.0
        %504 = vmatpush2.msra.mxu0 0.0
        %505 = vmatprep.subr.mxu0 0.0
        %506 = vmatpush2.msra.mxu0 0.0
        %507 = vmatprep.subr.mxu0 0.0
        %508 = vmatpush2.msra.mxu0 0.0
        %509 = vmatprep.subr.mxu0 0.0
        %510 = vmatpush2.msra.mxu0 0.0
        %511 = vmatprep.subr.mxu0 0.0
        %512 = vmatpush2.msra.mxu0 0.0
        %513 = vmatprep.subr.mxu0 0.0
        %514 = vmatpush2.msra.mxu0 0.0
        %515 = vmatprep.subr.mxu0 0.0
        %516 = vmatpush2.msra.mxu0 0.0
        %517 = vmatprep.subr.mxu0 0.0
        %518 = vmatpush2.msra.mxu0 0.0
        %519 = vmatprep.subr.mxu0 0.0
        %520 = vmatpush2.msra.mxu0 0.0
        %521 = vmatprep.mubr.f32.mxu0 0.0
        %522 = vmatmul.mubr.f32.gmra.mxu0 %v455
        %v523 = vpop.f32.mrf.mxu0
        %v524 = vadd.f32 %v451, %v523
        %v525 = vpop.f32.mrf.mxu0
        %526 = vdwg.mxu0
        %v527 = vmax.f32 %v524, 0.0
        %v528 = vld [vmem:[%s5] sm:$0x1]
        %v529 = vld [vmem:[#allocation2] sm:$0x1]
        %531 = vset.pattern.permute.xlu0 0
        %532 = vperm.xlu0 %531, %v529
        %v533 = vpop.permute.xlu0 %532
        %v535 = vlaneseq
        %v536 = vshrl.u32 %v535, 7
        %v537 = vsub.s32 0, %v536
        %v538 = vrot.slane %v533, %v537
        %v540 = vsel %vm453, %v528, 0
        %542 = vmatprep.subr.mxu0 0.0
        %543 = vmatpush1.msra.mxu0 0.0
        %544 = vmatprep.subr.mxu0 0.0
        %545 = vmatpush1.msra.mxu0 0.0
        %546 = vmatprep.subr.mxu0 0.0
        %547 = vmatpush1.msra.mxu0 0.0
        %548 = vmatprep.subr.mxu0 0.0
        %549 = vmatpush1.msra.mxu0 0.0
        %550 = vmatprep.subr.mxu0 0.0
        %551 = vmatpush1.msra.mxu0 0.0
        %552 = vmatprep.subr.mxu0 0.0
        %553 = vmatpush1.msra.mxu0 0.0
        %554 = vmatprep.subr.mxu0 0.0
        %555 = vmatpush1.msra.mxu0 0.0
        %556 = vmatprep.subr.mxu0 0.0
        %557 = vmatpush1.msra.mxu0 0.0
        %558 = vmatprep.subr.mxu0 0.0
        %559 = vmatpush1.msra.mxu0 0.0
        %560 = vmatprep.subr.mxu0 0.0
        %561 = vmatpush1.msra.mxu0 0.0
        %562 = vmatprep.subr.mxu0 0.0
        %563 = vmatpush1.msra.mxu0 0.0
        %564 = vmatprep.subr.mxu0 0.0
        %565 = vmatpush1.msra.mxu0 0.0
        %566 = vmatprep.subr.mxu0 0.0
        %567 = vmatpush1.msra.mxu0 0.0
        %568 = vmatprep.subr.mxu0 0.0
        %569 = vmatpush1.msra.mxu0 0.0
        %570 = vmatprep.subr.mxu0 0.0
        %571 = vmatpush1.msra.mxu0 0.0
        %572 = vmatprep.subr.mxu0 0.0
        %573 = vmatpush1.msra.mxu0 %v527
        %574 = vmatprep.subr.mxu0 0.0
        %575 = vmatpush2.msra.mxu0 0.0
        %576 = vmatprep.subr.mxu0 0.0
        %577 = vmatpush2.msra.mxu0 0.0
        %578 = vmatprep.subr.mxu0 0.0
        %579 = vmatpush2.msra.mxu0 0.0
        %580 = vmatprep.subr.mxu0 0.0
        %581 = vmatpush2.msra.mxu0 0.0
        %582 = vmatprep.subr.mxu0 0.0
        %583 = vmatpush2.msra.mxu0 0.0
        %584 = vmatprep.subr.mxu0 0.0
        %585 = vmatpush2.msra.mxu0 0.0
        %586 = vmatprep.subr.mxu0 0.0
        %587 = vmatpush2.msra.mxu0 0.0
        %588 = vmatprep.subr.mxu0 0.0
        %589 = vmatpush2.msra.mxu0 0.0
        %590 = vmatprep.subr.mxu0 0.0
        %591 = vmatpush2.msra.mxu0 0.0
        %592 = vmatprep.subr.mxu0 0.0
        %593 = vmatpush2.msra.mxu0 0.0
        %594 = vmatprep.subr.mxu0 0.0
        %595 = vmatpush2.msra.mxu0 0.0
        %596 = vmatprep.subr.mxu0 0.0
        %597 = vmatpush2.msra.mxu0 0.0
        %598 = vmatprep.subr.mxu0 0.0
        %599 = vmatpush2.msra.mxu0 0.0
        %600 = vmatprep.subr.mxu0 0.0
        %601 = vmatpush2.msra.mxu0 0.0
        %602 = vmatprep.subr.mxu0 0.0
        %603 = vmatpush2.msra.mxu0 0.0
        %604 = vmatprep.subr.mxu0 0.0
        %605 = vmatpush2.msra.mxu0 0.0
        %606 = vmatprep.mubr.f32.mxu0 0.0
        %607 = vmatmul.mubr.f32.gmra.mxu0 %v540
        %v608 = vpop.f32.mrf.mxu0
        %v609 = vadd.f32 %v538, %v608
        %v610 = vpop.f32.mrf.mxu0
        %611 = vdwg.mxu0
        %v612 = vsub.f32 0.0, %v609
        %v613 = vmul.f32 %v612, 1.442695
        %v614 = vpow.pop %v613
        %v615 = vadd.f32 %v614, 1.0
        %v616 = vrcp.pop %v615
        %617 = vst [vmem:[%s285] sm:$0x1] %v616
        %s618 = sand.u32 %s183, 1
        %s619 = scalar_lea.sflag [#allocation4], %s618
        %s620 = sand.u32 %s183, 1
        %s621 = scalar_lea.vmem [#allocation3], %s620
        // Predicated region
        $region49: #{bandit_forward.1} parent=47 // pred_check
          %p622 = pneg %p193
        $region50: #{bandit_forward.1} parent=47 // pred_check_branch
          %624 = sbr.rel (%p622) target = $region52
        $region51: #{bandit_forward.1} parent=47 // pred_region
          %s626 = ssub.s32 16, 16
          %627 = vsyncadd %s619, %s626
          %s628 = smul.addr %s23, 16
          %s629 = scalar_lea.hbm %s7, %s628
          %s631 = sshll.u32 %s621, 4
          %s632 = int_to_ptr.vmem [resolvable:$true] %s631
          %634 = dma.vmem_to_hbm [thread:$0]  %s632, 16, %s629, %s619
        $region52: #{bandit_forward.1} parent=47 // pred_fallthru
          _
      $region48: #{bandit_forward.1} parent=5 // pred_fallthru
        _
      %p635 = scmp.le.s32.totalorder 2, %s18
      // Predicated region
      $region53: #{bandit_forward.1} parent=5 // pred_check
        %p636 = pneg %p635
      $region54: #{bandit_forward.1} parent=5 // pred_check_branch
        %638 = sbr.rel (%p636) target = $region56
      $region55: #{bandit_forward.1} parent=5 // pred_region
        %s639 = ssub.s32 %s18, 2
        // Predicated region
        $region57: #{bandit_forward.1} parent=55 // pred_check
          %p640 = pneg %p199
        $region58: #{bandit_forward.1} parent=55 // pred_check_branch
          %642 = sbr.rel (%p640) target = $region60
        $region59: #{bandit_forward.1} parent=55 // pred_region
          %s643 = sand.u32 %s184, 1
          %s644 = scalar_lea.sflag [#allocation4], %s643
          %s645 = sand.u32 %s184, 1
          %s646 = scalar_lea.vmem [#allocation3], %s645
          %647 = dma.done %s644, 16
        $region60: #{bandit_forward.1} parent=55 // pred_fallthru
          _
      $region56: #{bandit_forward.1} parent=5 // pred_fallthru
        _
    $region6: #{bandit_forward.1} parent=1 // loop_footer
      %s22 = sadd.s32 1, %s18
    $region7: #{bandit_forward.1} parent=1 // loop_footer_branch
      %17 = sbr.rel target = $region3
    $region8: #{bandit_forward.1} parent=1 // loop_exit
      _
    %648 = vsyncpa [#allocation4], 1
    %s649 = scalar_lea.sflag [#allocation4], 1
    %650 = vsyncpa %s649, 1

</llo_original>
